<compile_context>
chip_gen: v7x
topology: tpu7x:2x2x1
jax: 0.10.0
libtpu: 0.0.40
codegen_flags: <defaults>
</compile_context>

<pallas_src>
import math
import jax
import jax.numpy as jnp
from jax.experimental import pallas as pl
from jax.experimental.pallas import tpu as pltpu

VOCAB = 10
VOCAB_PAD = 16          # padded one-hot / table lane dim
EMB_DIM = 128
HID = 64
TRANS_OUT = 3 * 7       # 21
ROT_OUT = 3 * 7         # 21
MASK_OUT = 2 * 7        # 14
OUT_REAL = TRANS_OUT + ROT_OUT + MASK_OUT   # 56
OUT_PAD = 64            # padded output sublane dim (multiple of 8)


def net_kernel(idx_ref, tab_ref, out_ref):
    """Per tile: out(:, lane) = final_table[:, token(lane)] via a one-hot MXU matmul."""
    idx = idx_ref[...]                                            # (1, tile) int32
    tile = idx.shape[1]
    iota = jax.lax.broadcasted_iota(jnp.int32, (VOCAB_PAD, tile), 0)
    onehot = (iota == idx).astype(jnp.float32)                    # (16, tile)
    # (64, 16) @ (16, tile) -> (64, tile): full-lane, unmasked stores.
    out_ref[...] = jnp.dot(tab_ref[...], onehot,
                           preferred_element_type=jnp.float32)


def init_linear(key, fan_in, fan_out):
    """Deterministic init mimicking nn.Linear defaults; weight stored (in, out)."""
    kw, kb = jax.random.split(key)
    bound = 1.0 / math.sqrt(fan_in)
    w = jax.random.uniform(kw, (fan_in, fan_out), jnp.float32, -bound, bound)
    b = jax.random.uniform(kb, (1, fan_out), jnp.float32, -bound, bound)
    return w, b


def make_params(key):
    keys = jax.random.split(key, 7)
    emb = jax.random.normal(keys[0], (VOCAB, EMB_DIM), jnp.float32)  # nn.Embedding: N(0,1)
    w1a, b1a = init_linear(keys[1], EMB_DIM, HID)   # MLP(128, 64) #1
    w1b, b1b = init_linear(keys[2], EMB_DIM, HID)   # MLP(128, 64) #2
    w1c, b1c = init_linear(keys[3], EMB_DIM, HID)   # MLP(128, 64) #3
    wt, bt = init_linear(keys[4], HID, TRANS_OUT)   # trans head
    wr, br = init_linear(keys[5], HID, ROT_OUT)     # rot head
    wm, bm = init_linear(keys[6], HID, MASK_OUT)    # mask head
    return (emb, w1a, b1a, w1b, b1b, w1c, b1c, wt, bt, wr, br, wm, bm)


def fuse_params(params):
    """Offline complete fold: the whole net collapses to a per-token lookup table.

    Returns final_table_t of shape (OUT_PAD, VOCAB_PAD) = (64, 16), f32,
    with output features on sublanes and vocab ids on lanes (transposed layout).
    """
    (emb, w1a, b1a, w1b, b1b, w1c, b1c, wt, bt, wr, br, wm, bm) = params

    w1 = jnp.concatenate([w1a, w1b, w1c], axis=1)                 # (128, 192)
    b1 = jnp.concatenate([b1a, b1b, b1c], axis=1)                 # (1, 192)
    h = jnp.maximum(emb @ w1 + b1, 0.0)                           # (10, 192) = relu hidden

    out_t = h[:, 0 * HID:1 * HID] @ wt + bt                       # (10, 21)
    out_r = h[:, 1 * HID:2 * HID] @ wr + br                       # (10, 21)
    out_m = h[:, 2 * HID:3 * HID] @ wm + bm                       # (10, 14)
    table = jnp.concatenate([out_t, out_r, out_m], axis=1)        # (10, 56)

    table = jnp.pad(table, ((0, VOCAB_PAD - VOCAB), (0, OUT_PAD - OUT_REAL)))  # (16, 64)
    return table.T                                                # (64, 16)


def net_forward(indices, final_table_t, *, tile_n=8192):
    """indices: (B, L) int32 in [0, VOCAB). Returns (trans, rot, mask)."""
    B, L = indices.shape
    N = B * L

    # Token tiling along lanes: tile must be a multiple of 128.
    tile_n = max(128, (tile_n // 128) * 128)
    tile = min(tile_n, max(128, pl.cdiv(N, 128) * 128))
    n_pad = pl.cdiv(N, tile) * tile
    n_tiles = n_pad // tile

    idx = indices.reshape(N).astype(jnp.int32)
    idx = jnp.pad(idx, (0, n_pad - N)).reshape(1, n_pad)           # lane-major ids

    bytes_accessed = (idx.size * 4                                  # ids in
                      + OUT_PAD * VOCAB_PAD * 4                     # resident table
                      + OUT_PAD * n_pad * 4)                        # output slab

    out = pl.pallas_call(
        net_kernel,
        out_shape=jax.ShapeDtypeStruct((OUT_PAD, n_pad), jnp.float32),
        grid=(n_tiles,),
        in_specs=[
            pl.BlockSpec((1, tile), lambda i: (0, i)),              # token ids, lane-dense
            pl.BlockSpec((OUT_PAD, VOCAB_PAD), lambda i: (0, 0)),   # resident folded table
        ],
        out_specs=pl.BlockSpec((OUT_PAD, tile), lambda i: (0, i)),  # lane-dense out slab
        compiler_params=pltpu.CompilerParams(
            dimension_semantics=("parallel",)),                     # 2 TCs on v7x
        cost_estimate=pl.CostEstimate(
            flops=2 * n_pad * VOCAB_PAD * OUT_PAD,
            transcendentals=0,
            bytes_accessed=bytes_accessed),
    )(idx, final_table_t)

    out = out[:OUT_REAL, :N].T                                      # (N, 56)
    trans = out[:, 0:TRANS_OUT].reshape(B, L, TRANS_OUT)
    rot = out[:, TRANS_OUT:TRANS_OUT + ROT_OUT].reshape(B, L, ROT_OUT)
    mask = out[:, TRANS_OUT + ROT_OUT:OUT_REAL].reshape(B, L, MASK_OUT)
    return trans, rot, mask


def net_forward_ref(indices, params):
    """Pure-JAX reference on the RAW (unfused) parameters."""
    (emb, w1a, b1a, w1b, b1b, w1c, b1c, wt, bt, wr, br, wm, bm) = params
    x = emb[indices]                                   # (B, L, 128)

    def head(w1, b1, w2, b2):
        h = jnp.maximum(x @ w1 + b1[0], 0.0)
        return h @ w2 + b2[0]

    return (head(w1a, b1a, wt, bt), head(w1b, b1b, wr, br), head(w1c, b1c, wm, bm))


if __name__ == "__main__":
    key = jax.random.PRNGKey(0)
    k_param, k_idx, k_idx2 = jax.random.split(key, 3)

    params = make_params(k_param)
    fused = fuse_params(params)

    # Small shapes consistent with the module: token grid (B=2, L=8).
    B, L = 2, 8
    indices = jax.random.randint(k_idx, (B, L), 0, VOCAB, dtype=jnp.int32)

    outs = jax.block_until_ready(net_forward(indices, fused))
    refs = net_forward_ref(indices, params)
    for o, r in zip(outs, refs):
        assert o.shape == r.shape and o.dtype == jnp.float32
        assert jnp.allclose(o, r, atol=1e-4, rtol=1e-4)

    # Multi-tile grid + remainder padding path (explicit small tile to force >= 2 tiles).
    B2, L2 = 4, 600                       # N=2400 -> 3 tiles of 1024 with padding
    indices2 = jax.random.randint(k_idx2, (B2, L2), 0, VOCAB, dtype=jnp.int32)
    outs2 = jax.block_until_ready(net_forward(indices2, fused, tile_n=1024))
    refs2 = net_forward_ref(indices2, params)
    for o, r in zip(outs2, refs2):
        assert jnp.allclose(o, r, atol=1e-4, rtol=1e-4)

    # Default (large-tile) path on the same inputs: single big tile, padded to 2432.
    outs3 = jax.block_until_ready(net_forward(indices2, fused))
    for o, r in zip(outs3, refs2):
        assert jnp.allclose(o, r, atol=1e-4, rtol=1e-4)

    print("KERNEL_OK")
</pallas_src>

<mosaic_0001>
module attributes {stable_mosaic.version = 11 : i64} {
  func.func @net_kernel(%arg0: i32, %arg1: memref<1x128xi32, #tpu.memory_space<vmem>>, %arg2: memref<64x16xf32, #tpu.memory_space<vmem>>, %arg3: memref<64x128xf32, #tpu.memory_space<vmem>>) attributes {dimension_semantics = [#tpu.dimension_semantics<parallel>], iteration_bounds = array<i64: 1>, scalar_prefetch = 0 : i64, scratch_operands = 0 : i64, tpu.core_type = #tpu.core_type<tc>, window_params = [{transform_indices = @transform_0, window_bounds = array<i64: 1, 128>}, {pipeline_mode = #tpu.pipeline_mode<synchronous>, transform_indices = @transform_1, window_bounds = array<i64: 64, 16>}, {transform_indices = @transform_2, window_bounds = array<i64: 64, 128>}]} {
    %c0 = arith.constant 0 : index
    %c0_0 = arith.constant 0 : index
    %0 = vector.load %arg1[%c0, %c0_0] : memref<1x128xi32, #tpu.memory_space<vmem>>, vector<1x128xi32>
    %1 = tpu.iota {dimensions = array<i32: 0>} : vector<16x128xi32>
    %2 = vector.broadcast %0 : vector<1x128xi32> to vector<16x128xi32>
    %3 = arith.cmpi eq, %1, %2 : vector<16x128xi32>
    %4 = arith.extui %3 : vector<16x128xi1> to vector<16x128xi32>
    %5 = arith.sitofp %4 : vector<16x128xi32> to vector<16x128xf32>
    %c0_1 = arith.constant 0 : index
    %c0_2 = arith.constant 0 : index
    %6 = vector.load %arg2[%c0_1, %c0_2] : memref<64x16xf32, #tpu.memory_space<vmem>>, vector<64x16xf32>
    %cst = arith.constant dense<0.000000e+00> : vector<64x128xf32>
    %7 = tpu.matmul %6, %5, %cst {dimension_numbers = #tpu.dot_dimension_numbers<[1], [0], [0], [1], [0, 0, 1, 1], [], []>} : vector<64x16xf32>, vector<16x128xf32>, vector<64x128xf32> -> vector<64x128xf32>
    %c0_3 = arith.constant 0 : index
    %c0_4 = arith.constant 0 : index
    %8 = vector.load %arg3[%c0_3, %c0_4] : memref<64x128xf32, #tpu.memory_space<vmem>>, vector<64x128xf32>
    tpu.vector_store %arg3[%c0_3, %c0_4], %7 {strides = array<i32>} : memref<64x128xf32, #tpu.memory_space<vmem>>, vector<64x128xf32>,
    return
  }
  func.func @transform_0(%arg0: i32) -> (i32, i32) {
    %c0_i32 = arith.constant 0 : i32
    %c0_i32_0 = arith.constant 0 : i32
    return %c0_i32, %arg0 : i32, i32
  }
  func.func @transform_1(%arg0: i32) -> (i32, i32) {
    %c0_i32 = arith.constant 0 : i32
    %c0_i32_0 = arith.constant 0 : i32
    %c0_i32_1 = arith.constant 0 : i32
    return %c0_i32, %c0_i32_0 : i32, i32
  }
  func.func @transform_2(%arg0: i32) -> (i32, i32) {
    %c0_i32 = arith.constant 0 : i32
    %c0_i32_0 = arith.constant 0 : i32
    return %c0_i32, %arg0 : i32, i32
  }
}

</mosaic_0001>

<llo_original>
// kernel: tpu_custom_call.1
$region0: #{tpu_custom_call.1}
  #allocation0 [shape = 'u32[]', space=smem, size = 0x4, offset = 0x4, fixed_abs, tag = 'smem constant byte address 0x4 - core index']
  #allocation1 [shape = 'u32[144,128]{1,0:T(1,128)}', space=vmem, size = 0x12000, scoped, tag = 'internal scratch']
  %s0 = inlined_call_operand.vmem [shape: s32[1,128], index: 0, kind: input, shape index: {}]
  %s1 = inlined_call_operand.vmem [shape: f32[64,16], index: 1, kind: input, shape index: {}]
  %s2 = inlined_call_operand.hbm [shape: f32[64,128], index: 2, kind: output, shape index: {}]
  %s3 = sld [smem:[#allocation0]]
  $region18: #{tpu_custom_call.1} parent=0
    _
  %s5 = ssub.s32 1, %s3
  %s6 = scalar_select 0, %s5, %s3
  $region1: #{tpu_custom_call.1} parent=0
    #allocation2 [shape = 'u8[32768]{0}', space=vmem, size = 0x8000, scoped, tag = 'output window, operand 0, single buffered']
    #allocation3 [shape = 's32[1]{0}', space=sflag, size = 0x4, scoped, tag = 'scoped memory for tpu_custom_call.1']
    %7 = vsyncpa [#allocation3], 0
    // Predicated region
    $region2: #{tpu_custom_call.1} parent=1 // pred_check
      _
    $region3: #{tpu_custom_call.1} parent=1 // pred_check_branch
      %9 = sbr.rel (0) target = $region5
    $region4: #{tpu_custom_call.1} parent=1 // pred_region
      _
    $region5: #{tpu_custom_call.1} parent=1 // pred_fallthru
      _
    // Predicated region
    $region6: #{tpu_custom_call.1} parent=1 // pred_check
      _
    $region7: #{tpu_custom_call.1} parent=1 // pred_check_branch
      %11 = sbr.rel (0) target = $region9
    $region8: #{tpu_custom_call.1} parent=1 // pred_region
      _
    $region9: #{tpu_custom_call.1} parent=1 // pred_fallthru
      _
    %v12 = vld [vmem:[%s0] sm:$0x1]
    %v13 = vlaneseq
    %v14 = vshrl.u32 %v13, 7
    %v15 = vadd.s32 %v14, 8
    %v16 = vlaneseq
    %v17 = vshrl.u32 %v16, 7
    %v18 = vsub.s32 0, %v17
    %v19 = vrot.slane %v12, %v18
    %vm20 = vcmp.eq.s32.totalorder %v14, %v19
    %vm21 = vcmp.eq.s32.totalorder %v15, %v19
    %v22 = vsel %vm20, 1, 0
    %v23 = vsel %vm21, 1, 0
    %v24 = vcvt.s32.f32 %v22
    %v25 = vcvt.s32.f32 %v23
    %v26 = vld [vmem:[%s1] sm:$0xff]
    %v27 = vld [vmem:[%s1 + $0x8] sm:$0xff]
    %v28 = vld [vmem:[%s1 + $0x10] sm:$0xff]
    %v29 = vld [vmem:[%s1 + $0x18] sm:$0xff]
    %v30 = vld [vmem:[%s1 + $0x20] sm:$0xff]
    %v31 = vld [vmem:[%s1 + $0x28] sm:$0xff]
    %v32 = vld [vmem:[%s1 + $0x30] sm:$0xff]
    %v33 = vld [vmem:[%s1 + $0x38] sm:$0xff]
    %vm34 = vcmask 130048
    %v36 = vsel %vm34, %v26, 0
    %v39 = vsel %vm34, %v27, 0
    %v42 = vsel %vm34, %v28, 0
    %v45 = vsel %vm34, %v29, 0
    %v48 = vsel %vm34, %v30, 0
    %v51 = vsel %vm34, %v31, 0
    %v54 = vsel %vm34, %v32, 0
    %v57 = vsel %vm34, %v33, 0
    %59 = vmatprep.subr.mxu0 0.0
    %60 = vmatpush1.msra.mxu0 %v24
    %61 = vmatprep.subr.mxu0 0.0
    %62 = vmatpush1.msra.mxu0 %v25
    %63 = vmatprep.subr.mxu0 0.0
    %64 = vmatpush1.msra.mxu0 0.0
    %65 = vmatprep.subr.mxu0 0.0
    %66 = vmatpush1.msra.mxu0 0.0
    %67 = vmatprep.subr.mxu0 0.0
    %68 = vmatpush1.msra.mxu0 0.0
    %69 = vmatprep.subr.mxu0 0.0
    %70 = vmatpush1.msra.mxu0 0.0
    %71 = vmatprep.subr.mxu0 0.0
    %72 = vmatpush1.msra.mxu0 0.0
    %73 = vmatprep.subr.mxu0 0.0
    %74 = vmatpush1.msra.mxu0 0.0
    %75 = vmatprep.subr.mxu0 0.0
    %76 = vmatpush1.msra.mxu0 0.0
    %77 = vmatprep.subr.mxu0 0.0
    %78 = vmatpush1.msra.mxu0 0.0
    %79 = vmatprep.subr.mxu0 0.0
    %80 = vmatpush1.msra.mxu0 0.0
    %81 = vmatprep.subr.mxu0 0.0
    %82 = vmatpush1.msra.mxu0 0.0
    %83 = vmatprep.subr.mxu0 0.0
    %84 = vmatpush1.msra.mxu0 0.0
    %85 = vmatprep.subr.mxu0 0.0
    %86 = vmatpush1.msra.mxu0 0.0
    %87 = vmatprep.subr.mxu0 0.0
    %88 = vmatpush1.msra.mxu0 0.0
    %89 = vmatprep.subr.mxu0 0.0
    %90 = vmatpush1.msra.mxu0 0.0
    %91 = vmatprep.subr.mxu0 0.0
    %92 = vmatpush1.msra.mxu0 0.0
    %93 = vmatprep.subr.mxu0 0.0
    %94 = vmatpush1.msra.mxu0 0.0
    %95 = vmatprep.subr.mxu0 0.0
    %96 = vmatpush1.msra.mxu0 0.0
    %97 = vmatprep.subr.mxu0 0.0
    %98 = vmatpush1.msra.mxu0 0.0
    %99 = vmatprep.subr.mxu0 0.0
    %100 = vmatpush1.msra.mxu0 0.0
    %101 = vmatprep.subr.mxu0 0.0
    %102 = vmatpush1.msra.mxu0 0.0
    %103 = vmatprep.subr.mxu0 0.0
    %104 = vmatpush1.msra.mxu0 0.0
    %105 = vmatprep.subr.mxu0 0.0
    %106 = vmatpush1.msra.mxu0 0.0
    %107 = vmatprep.subr.mxu0 0.0
    %108 = vmatpush1.msra.mxu0 0.0
    %109 = vmatprep.subr.mxu0 0.0
    %110 = vmatpush1.msra.mxu0 0.0
    %111 = vmatprep.subr.mxu0 0.0
    %112 = vmatpush1.msra.mxu0 0.0
    %113 = vmatprep.subr.mxu0 0.0
    %114 = vmatpush1.msra.mxu0 0.0
    %115 = vmatprep.subr.mxu0 0.0
    %116 = vmatpush1.msra.mxu0 0.0
    %117 = vmatprep.subr.mxu0 0.0
    %118 = vmatpush1.msra.mxu0 0.0
    %119 = vmatprep.subr.mxu0 0.0
    %120 = vmatpush1.msra.mxu0 0.0
    %121 = vmatprep.subr.mxu0 0.0
    %122 = vmatpush1.msra.mxu0 0.0
    %123 = vmatprep.mubr.f32.mxu0 0.0
    %124 = vmatmul.mubr.f32.gmra.mrb[0].mxu0 %v36
    %v125 = vpop.f32.mrb[0].mxu0
    %v126 = vadd.f32 0.0, %v125
    %v127 = vpop.f32.mrb[0].mxu0
    %128 = vmatprep.mubr.f32.mxu0 0.0
    %129 = vmatmul.mubr.f32.gmra.mrb[0].mxu0 %v39
    %v130 = vpop.f32.mrb[0].mxu0
    %v131 = vadd.f32 0.0, %v130
    %v132 = vpop.f32.mrb[0].mxu0
    %133 = vmatprep.mubr.f32.mxu0 0.0
    %134 = vmatmul.mubr.f32.gmra.mrb[0].mxu0 %v42
    %v135 = vpop.f32.mrb[0].mxu0
    %v136 = vadd.f32 0.0, %v135
    %v137 = vpop.f32.mrb[0].mxu0
    %138 = vmatprep.mubr.f32.mxu0 0.0
    %139 = vmatmul.mubr.f32.gmra.mrb[0].mxu0 %v45
    %v140 = vpop.f32.mrb[0].mxu0
    %v141 = vadd.f32 0.0, %v140
    %v142 = vpop.f32.mrb[0].mxu0
    %143 = vmatprep.mubr.f32.mxu0 0.0
    %144 = vmatmul.mubr.f32.gmra.mrb[0].mxu0 %v48
    %v145 = vpop.f32.mrb[0].mxu0
    %v146 = vadd.f32 0.0, %v145
    %v147 = vpop.f32.mrb[0].mxu0
    %148 = vmatprep.mubr.f32.mxu0 0.0
    %149 = vmatmul.mubr.f32.gmra.mrb[0].mxu0 %v51
    %v150 = vpop.f32.mrb[0].mxu0
    %v151 = vadd.f32 0.0, %v150
    %v152 = vpop.f32.mrb[0].mxu0
    %153 = vmatprep.mubr.f32.mxu0 0.0
    %154 = vmatmul.mubr.f32.gmra.mrb[0].mxu0 %v54
    %v155 = vpop.f32.mrb[0].mxu0
    %v156 = vadd.f32 0.0, %v155
    %v157 = vpop.f32.mrb[0].mxu0
    %158 = vmatprep.mubr.f32.mxu0 0.0
    %159 = vmatmul.mubr.f32.gmra.mrb[0].mxu0 %v57
    %v160 = vpop.f32.mrb[0].mxu0
    %v161 = vadd.f32 0.0, %v160
    %v162 = vpop.f32.mrb[0].mxu0
    %163 = vdwg.mxu0
    %164 = vst [vmem:[#allocation2] sm:$0xff] %v126
    %165 = vst [vmem:[#allocation2 + $0x8] sm:$0xff] %v131
    %166 = vst [vmem:[#allocation2 + $0x10] sm:$0xff] %v136
    %167 = vst [vmem:[#allocation2 + $0x18] sm:$0xff] %v141
    %168 = vst [vmem:[#allocation2 + $0x20] sm:$0xff] %v146
    %169 = vst [vmem:[#allocation2 + $0x28] sm:$0xff] %v151
    %170 = vst [vmem:[#allocation2 + $0x30] sm:$0xff] %v156
    %171 = vst [vmem:[#allocation2 + $0x38] sm:$0xff] %v161
    // Predicated region
    $region10: #{tpu_custom_call.1} parent=1 // pred_check
      _
    $region11: #{tpu_custom_call.1} parent=1 // pred_check_branch
      %173 = sbr.rel (0) target = $region13
    $region12: #{tpu_custom_call.1} parent=1 // pred_region
      %s175 = ssub.s32 1024, 1024
      %176 = vsyncadd [#allocation3], %s175
      %s177 = sshll.u32 [#allocation2], 4
      %s178 = int_to_ptr.vmem [resolvable:$true] %s177
      %183 = dma.vmem_to_hbm [thread:$0]  %s178, 1024, %s2, [#allocation3], 128, 128, 8
    $region13: #{tpu_custom_call.1} parent=1 // pred_fallthru
      _
    // Predicated region
    $region14: #{tpu_custom_call.1} parent=1 // pred_check
      _
    $region15: #{tpu_custom_call.1} parent=1 // pred_check_branch
      %185 = sbr.rel (0) target = $region17
    $region16: #{tpu_custom_call.1} parent=1 // pred_region
      %186 = dma.done [#allocation3], 1024
    $region17: #{tpu_custom_call.1} parent=1 // pred_fallthru
      _
    %187 = vsyncpa [#allocation3], 1

</llo_original>
